<compile_context>
chip_gen: v5e
topology: v5e:2x2
jax: 0.10.0
libtpu: 0.0.40
codegen_flags: <defaults>
</compile_context>

<pallas_src>
import functools

import jax
import jax.numpy as jnp
from jax import lax
from jax.experimental import pallas as pl
from jax.experimental.pallas import tpu as pltpu

KERNEL_SIZE = 7
PAD = 3                              # padding = 3 for kernel_size 7
_VMEM_LIMIT = 32 * 1024 * 1024       # explicit, safe on v5e/v6e/v7x
_X_BLOCK_BYTES = 512 * 1024          # target bytes per x block
_MAX_LANE_TILE = 4096                # max lanes per block (multiple of 128)


def _pick_tile(n, align, limit):
    """Largest divisor of n that is a multiple of `align` and <= limit.
    Falls back to n (a full-extent dim is always a legal block extent)."""
    limit = max(1, min(n, limit))
    for d in range(limit, 0, -1):
        if n % d == 0 and d % align == 0:
            return d
    return n


# ---------------------------------------------------------------------------
# Pass 1: fused channel sum + max reduction over C, lane-dense over H*W.
# ---------------------------------------------------------------------------
def _reduce_kernel(x_ref, sum_ref, max_ref):
    # x_ref:   (tc, t_hw)  native dtype
    # sum_ref: (1, t_hw)   f32   (resident across the c-tile axis)
    # max_ref: (1, t_hw)   f32
    xb = x_ref[...]
    psum = jnp.sum(xb, axis=0, keepdims=True, dtype=jnp.float32)
    pmax = jnp.max(xb, axis=0, keepdims=True).astype(jnp.float32)

    ci = pl.program_id(2)

    @pl.when(ci == 0)
    def _():
        sum_ref[...] = psum
        max_ref[...] = pmax

    @pl.when(ci != 0)
    def _():
        sum_ref[...] = sum_ref[...] + psum
        max_ref[...] = jnp.maximum(max_ref[...], pmax)


# ---------------------------------------------------------------------------
# Pass 2: 7x7 conv (2->1 channels) + hardsigmoid on the tiny (H, W) maps.
# ---------------------------------------------------------------------------
def _conv_kernel(w_ref, sum_ref, max_ref, att_ref, pm_pad, px_pad, *,
                 c_total, h, w):
    # w_ref:   SMEM (98,) f32 -- [mean-channel 7x7 taps | max-channel 7x7 taps]
    # sum_ref: (h, w) f32; max_ref: (h, w) f32; att_ref: (h, w) f32
    # pm_pad / px_pad: VMEM (h+6, w+6) f32 scratch for zero padding.
    inv_c = 1.0 / c_total

    # Zero the (small) padded scratch every step (keeps borders correct on
    # every core), then write the interior maps.
    pm_pad[...] = jnp.zeros(pm_pad.shape, jnp.float32)
    px_pad[...] = jnp.zeros(px_pad.shape, jnp.float32)
    pm_pad[PAD:PAD + h, PAD:PAD + w] = sum_ref[...] * inv_c
    px_pad[PAD:PAD + h, PAD:PAD + w] = max_ref[...]

    pm_full = pm_pad[...]            # (h+6, w+6)
    px_full = px_pad[...]

    acc = jnp.zeros((h, w), jnp.float32)
    # Hoist lane-direction (kx) shifts out of the 49-tap loop: 7 lane slices
    # per map; the inner ky loop only does cheap sublane slices + FMA.
    for kx in range(KERNEL_SIZE):
        pm_strip = pm_full[:, kx:kx + w]          # (h+6, w)
        px_strip = px_full[:, kx:kx + w]
        for ky in range(KERNEL_SIZE):
            wm = w_ref[ky * KERNEL_SIZE + kx]
            wx = w_ref[KERNEL_SIZE * KERNEL_SIZE + ky * KERNEL_SIZE + kx]
            acc = acc + wm * pm_strip[ky:ky + h, :]
            acc = acc + wx * px_strip[ky:ky + h, :]

    # hardsigmoid: clip(x/6 + 0.5, 0, 1)
    att_ref[...] = jnp.clip(acc * (1.0 / 6.0) + 0.5, 0.0, 1.0)


# ---------------------------------------------------------------------------
# Pass 3: out = x * att on lane-dense (C, H*W) tiles.
# ---------------------------------------------------------------------------
def _mul_kernel(x_ref, att_ref, o_ref):
    # x_ref: (tc, t_hw) native dtype; att_ref: (1, t_hw) f32
    o_ref[...] = x_ref[...] * att_ref[...].astype(x_ref.dtype)


def spatial_attention(x, weight):
    """x: (B, C, H, W); weight: (1, 2, 7, 7) PyTorch-layout conv weight."""
    b, c, h, w = x.shape
    hw = h * w
    x2 = x.reshape(b, c, hw)                          # lane-dense last dim (free reshape)
    w_flat = weight.astype(jnp.float32).reshape(-1)   # (98,) SMEM scalars

    itemsize = x.dtype.itemsize
    t_hw = _pick_tile(hw, 128, _MAX_LANE_TILE)
    tc = _pick_tile(c, 8, max(1, _X_BLOCK_BYTES // (t_hw * itemsize)))
    n_hw = hw // t_hw
    n_c = c // tc

    # ---- pass 1: channel sum & max maps, shape (B, 1, HW) f32 --------------
    sum_map, max_map = pl.pallas_call(
        _reduce_kernel,
        out_shape=(jax.ShapeDtypeStruct((b, 1, hw), jnp.float32),
                   jax.ShapeDtypeStruct((b, 1, hw), jnp.float32)),
        grid_spec=pltpu.PrefetchScalarGridSpec(
            num_scalar_prefetch=0,
            grid=(b, n_hw, n_c),
            in_specs=[pl.BlockSpec((pl.Squeezed(), tc, t_hw),
                                   lambda bi, j, ci: (bi, ci, j))],
            out_specs=[pl.BlockSpec((pl.Squeezed(), 1, t_hw),
                                    lambda bi, j, ci: (bi, 0, j)),
                       pl.BlockSpec((pl.Squeezed(), 1, t_hw),
                                    lambda bi, j, ci: (bi, 0, j))],
        ),
        compiler_params=pltpu.CompilerParams(
            dimension_semantics=("parallel", "parallel", "arbitrary"),
            vmem_limit_bytes=_VMEM_LIMIT),
    )(x2)

    # ---- pass 2: 7x7 conv + hardsigmoid on the tiny 2-channel map ----------
    att = pl.pallas_call(
        functools.partial(_conv_kernel, c_total=c, h=h, w=w),
        out_shape=jax.ShapeDtypeStruct((b, h, w), jnp.float32),
        grid_spec=pltpu.PrefetchScalarGridSpec(
            num_scalar_prefetch=0,
            grid=(b,),
            in_specs=[pl.BlockSpec(memory_space=pltpu.SMEM),
                      pl.BlockSpec((pl.Squeezed(), h, w), lambda bi: (bi, 0, 0)),
                      pl.BlockSpec((pl.Squeezed(), h, w), lambda bi: (bi, 0, 0))],
            out_specs=pl.BlockSpec((pl.Squeezed(), h, w), lambda bi: (bi, 0, 0)),
            scratch_shapes=[pltpu.VMEM((h + 2 * PAD, w + 2 * PAD), jnp.float32),
                            pltpu.VMEM((h + 2 * PAD, w + 2 * PAD), jnp.float32)],
        ),
        compiler_params=pltpu.CompilerParams(
            dimension_semantics=("parallel",),
            vmem_limit_bytes=_VMEM_LIMIT),
    )(w_flat, sum_map.reshape(b, h, w), max_map.reshape(b, h, w))

    # ---- pass 3: out = x * att, lane-dense (C, HW) tiles --------------------
    out2 = pl.pallas_call(
        _mul_kernel,
        out_shape=jax.ShapeDtypeStruct((b, c, hw), x.dtype),
        grid_spec=pltpu.PrefetchScalarGridSpec(
            num_scalar_prefetch=0,
            grid=(b, n_c, n_hw),
            in_specs=[pl.BlockSpec((pl.Squeezed(), tc, t_hw),
                                   lambda bi, ci, j: (bi, ci, j)),
                      pl.BlockSpec((pl.Squeezed(), 1, t_hw),
                                   lambda bi, ci, j: (bi, 0, j))],
            out_specs=pl.BlockSpec((pl.Squeezed(), tc, t_hw),
                                   lambda bi, ci, j: (bi, ci, j)),
        ),
        compiler_params=pltpu.CompilerParams(
            dimension_semantics=("parallel", "parallel", "parallel"),
            vmem_limit_bytes=_VMEM_LIMIT),
    )(x2, att.reshape(b, 1, hw))

    return out2.reshape(b, c, h, w)


def spatial_attention_ref(x, weight):
    """Pure-JAX reference matching the PyTorch forward."""
    xf = x.astype(jnp.float32)
    mean_map = jnp.mean(xf, axis=1, keepdims=True)          # (B,1,H,W)
    max_map = jnp.max(xf, axis=1, keepdims=True)             # (B,1,H,W)
    cat = jnp.concatenate([mean_map, max_map], axis=1)       # (B,2,H,W)
    conv = lax.conv_general_dilated(
        cat, weight.astype(jnp.float32),
        window_strides=(1, 1),
        padding=((PAD, PAD), (PAD, PAD)),
        dimension_numbers=("NCHW", "OIHW", "NCHW"),
    )                                                        # (B,1,H,W)
    att = jnp.clip(conv / 6.0 + 0.5, 0.0, 1.0)
    return (xf * att).astype(x.dtype)


if __name__ == "__main__":
    key = jax.random.PRNGKey(0)
    kx, kw, kx2, kw2 = jax.random.split(key, 4)

    # Test 1: the canonical small shape.
    B, C, H, W = 2, 4, 16, 16
    x = jax.random.normal(kx, (B, C, H, W), dtype=jnp.float32)
    weight = 0.1 * jax.random.normal(kw, (1, 2, KERNEL_SIZE, KERNEL_SIZE),
                                     dtype=jnp.float32)
    out = jax.block_until_ready(spatial_attention(x, weight))
    ref = spatial_attention_ref(x, weight)
    assert out.shape == x.shape and out.dtype == x.dtype
    assert jnp.allclose(out, ref, atol=1e-5, rtol=1e-5), "mismatch vs reference (test 1)"

    # Test 2: odd spatial dims / more channels (H*W not a multiple of 128).
    B2, C2, H2, W2 = 1, 16, 12, 20
    x2 = jax.random.normal(kx2, (B2, C2, H2, W2), dtype=jnp.float32)
    weight2 = 0.1 * jax.random.normal(kw2, (1, 2, KERNEL_SIZE, KERNEL_SIZE),
                                      dtype=jnp.float32)
    out2 = jax.block_until_ready(spatial_attention(x2, weight2))
    ref2 = spatial_attention_ref(x2, weight2)
    assert out2.shape == x2.shape and out2.dtype == x2.dtype
    assert jnp.allclose(out2, ref2, atol=1e-5, rtol=1e-5), "mismatch vs reference (test 2)"

    print("KERNEL_OK")
</pallas_src>

<mosaic_0001>
module attributes {stable_mosaic.version = 11 : i64} {
  func.func @_reduce_kernel(%arg0: i32, %arg1: i32, %arg2: i32, %arg3: memref<1x4x256xf32, #tpu.memory_space<vmem>>, %arg4: memref<1x1x256xf32, #tpu.memory_space<vmem>>, %arg5: memref<1x1x256xf32, #tpu.memory_space<vmem>>) attributes {dimension_semantics = [#tpu.dimension_semantics<parallel>, #tpu.dimension_semantics<parallel>, #tpu.dimension_semantics<arbitrary>], iteration_bounds = array<i64: 2, 1, 1>, scalar_prefetch = 0 : i64, scratch_operands = 0 : i64, tpu.core_type = #tpu.core_type<tc>, window_params = [{transform_indices = @transform_0, window_bounds = array<i64: 1, 4, 256>}, {transform_indices = @transform_1, window_bounds = array<i64: 1, 1, 256>}, {transform_indices = @transform_2, window_bounds = array<i64: 1, 1, 256>}]} {
    %c0 = arith.constant 0 : index
    %c0_0 = arith.constant 0 : index
    %c0_1 = arith.constant 0 : index
    %0 = vector.load %arg3[%c0, %c0_0, %c0_1] : memref<1x4x256xf32, #tpu.memory_space<vmem>>, vector<1x4x256xf32>
    %1 = vector.shape_cast %0 : vector<1x4x256xf32> to vector<4x256xf32>
    %cst = arith.constant dense<0.000000e+00> : vector<256xf32>
    %2 = vector.multi_reduction <add>, %1, %cst [0] : vector<4x256xf32> to vector<256xf32>
    %3 = vector.shape_cast %2 : vector<256xf32> to vector<1x256xf32>
    %cst_2 = arith.constant dense<0xFF800000> : vector<256xf32>
    %4 = vector.multi_reduction <maximumf>, %1, %cst_2 [0] : vector<4x256xf32> to vector<256xf32>
    %5 = vector.shape_cast %4 : vector<256xf32> to vector<1x256xf32>
    %c0_i32 = arith.constant 0 : i32
    %6 = arith.cmpi eq, %arg2, %c0_i32 : i32
    %7 = arith.extui %6 : i1 to i32
    %c0_i32_3 = arith.constant 0 : i32
    %8 = arith.cmpi ne, %7, %c0_i32_3 : i32
    scf.if %8 {
      %c0_6 = arith.constant 0 : index
      %c0_7 = arith.constant 0 : index
      %c0_8 = arith.constant 0 : index
      %12 = vector.load %arg4[%c0_6, %c0_7, %c0_8] : memref<1x1x256xf32, #tpu.memory_space<vmem>>, vector<1x1x256xf32>
      %13 = vector.shape_cast %12 : vector<1x1x256xf32> to vector<1x256xf32>
      %14 = vector.shape_cast %3 : vector<1x256xf32> to vector<1x1x256xf32>
      tpu.vector_store %arg4[%c0_6, %c0_7, %c0_8], %14 {strides = array<i32>} : memref<1x1x256xf32, #tpu.memory_space<vmem>>, vector<1x1x256xf32>,
      %c0_9 = arith.constant 0 : index
      %c0_10 = arith.constant 0 : index
      %c0_11 = arith.constant 0 : index
      %15 = vector.load %arg5[%c0_9, %c0_10, %c0_11] : memref<1x1x256xf32, #tpu.memory_space<vmem>>, vector<1x1x256xf32>
      %16 = vector.shape_cast %15 : vector<1x1x256xf32> to vector<1x256xf32>
      %17 = vector.shape_cast %5 : vector<1x256xf32> to vector<1x1x256xf32>
      tpu.vector_store %arg5[%c0_9, %c0_10, %c0_11], %17 {strides = array<i32>} : memref<1x1x256xf32, #tpu.memory_space<vmem>>, vector<1x1x256xf32>,
    } else {
    }
    %c0_i32_4 = arith.constant 0 : i32
    %9 = arith.cmpi ne, %arg2, %c0_i32_4 : i32
    %10 = arith.extui %9 : i1 to i32
    %c0_i32_5 = arith.constant 0 : i32
    %11 = arith.cmpi ne, %10, %c0_i32_5 : i32
    scf.if %11 {
      %c0_6 = arith.constant 0 : index
      %c0_7 = arith.constant 0 : index
      %c0_8 = arith.constant 0 : index
      %12 = vector.load %arg4[%c0_6, %c0_7, %c0_8] : memref<1x1x256xf32, #tpu.memory_space<vmem>>, vector<1x1x256xf32>
      %13 = vector.shape_cast %12 : vector<1x1x256xf32> to vector<1x256xf32>
      %14 = arith.addf %13, %3 : vector<1x256xf32>
      %c0_9 = arith.constant 0 : index
      %c0_10 = arith.constant 0 : index
      %c0_11 = arith.constant 0 : index
      %15 = vector.load %arg4[%c0_9, %c0_10, %c0_11] : memref<1x1x256xf32, #tpu.memory_space<vmem>>, vector<1x1x256xf32>
      %16 = vector.shape_cast %15 : vector<1x1x256xf32> to vector<1x256xf32>
      %17 = vector.shape_cast %14 : vector<1x256xf32> to vector<1x1x256xf32>
      tpu.vector_store %arg4[%c0_9, %c0_10, %c0_11], %17 {strides = array<i32>} : memref<1x1x256xf32, #tpu.memory_space<vmem>>, vector<1x1x256xf32>,
      %c0_12 = arith.constant 0 : index
      %c0_13 = arith.constant 0 : index
      %c0_14 = arith.constant 0 : index
      %18 = vector.load %arg5[%c0_12, %c0_13, %c0_14] : memref<1x1x256xf32, #tpu.memory_space<vmem>>, vector<1x1x256xf32>
      %19 = vector.shape_cast %18 : vector<1x1x256xf32> to vector<1x256xf32>
      %20 = arith.maximumf %19, %5 : vector<1x256xf32>
      %c0_15 = arith.constant 0 : index
      %c0_16 = arith.constant 0 : index
      %c0_17 = arith.constant 0 : index
      %21 = vector.load %arg5[%c0_15, %c0_16, %c0_17] : memref<1x1x256xf32, #tpu.memory_space<vmem>>, vector<1x1x256xf32>
      %22 = vector.shape_cast %21 : vector<1x1x256xf32> to vector<1x256xf32>
      %23 = vector.shape_cast %20 : vector<1x256xf32> to vector<1x1x256xf32>
      tpu.vector_store %arg5[%c0_15, %c0_16, %c0_17], %23 {strides = array<i32>} : memref<1x1x256xf32, #tpu.memory_space<vmem>>, vector<1x1x256xf32>,
    } else {
    }
    return
  }
  func.func @transform_0(%arg0: i32, %arg1: i32, %arg2: i32) -> (i32, i32, i32) {
    %c0_i32 = arith.constant 0 : i32
    return %arg0, %arg2, %arg1 : i32, i32, i32
  }
  func.func @transform_1(%arg0: i32, %arg1: i32, %arg2: i32) -> (i32, i32, i32) {
    %c0_i32 = arith.constant 0 : i32
    %c0_i32_0 = arith.constant 0 : i32
    return %arg0, %c0_i32, %arg1 : i32, i32, i32
  }
  func.func @transform_2(%arg0: i32, %arg1: i32, %arg2: i32) -> (i32, i32, i32) {
    %c0_i32 = arith.constant 0 : i32
    %c0_i32_0 = arith.constant 0 : i32
    return %arg0, %c0_i32, %arg1 : i32, i32, i32
  }
}

</mosaic_0001>

<llo_original>
// kernel: tpu_custom_call.1
$region0: #{tpu_custom_call.1}
  #allocation0 [shape = 'u32[]', space=smem, size = 0x4, offset = 0x4, fixed_abs, tag = 'smem constant byte address 0x4 - core index']
  #allocation1 [shape = 'u32[72,128]{1,0:T(1,128)}', space=vmem, size = 0x9000, scoped, tag = 'internal scratch']
  %s0 = inlined_call_operand.hbm [shape: f32[2,4,256], index: 0, kind: input, shape index: {}]
  %s1 = inlined_call_operand.hbm [shape: f32[2,1,256], index: 1, kind: output, shape index: {0}]
  %s2 = inlined_call_operand.hbm [shape: f32[2,1,256], index: 2, kind: output, shape index: {1}]
  %3 = xla_tuple %s1, %s2
  %s4 = sld [smem:[#allocation0]]
  $region57: #{tpu_custom_call.1} parent=0
    _
  %s6 = ssub.s32 1, %s4
  %s7 = scalar_select 0, %s6, %s4
  $region1: #{tpu_custom_call.1} parent=0
    #allocation2 [shape = 'u8[8192]{0}', space=vmem, size = 0x2000, scoped, tag = 'input window, operand 0']
    #allocation3 [shape = 's32[2]{0}', space=sflag, size = 0x8, scoped, tag = 'scoped memory for tpu_custom_call.1']
    #allocation4 [shape = 's32[2]{0}', space=sflag, size = 0x8, scoped, tag = 'scoped memory for tpu_custom_call.1']
    #allocation5 [shape = 'u8[2048]{0}', space=vmem, size = 0x800, scoped, tag = 'output window, operand 0']
    #allocation6 [shape = 'u8[2048]{0}', space=vmem, size = 0x800, scoped, tag = 'output window, operand 1']
    #allocation7 [shape = 's32[2]{0}', space=sflag, size = 0x8, scoped, tag = 'scoped memory for tpu_custom_call.1']
    %8 = vsyncpa [#allocation3], 0
    %s9 = scalar_lea.sflag [#allocation3], 1
    %10 = vsyncpa %s9, 0
    %11 = vsyncpa [#allocation4], 0
    %s12 = scalar_lea.sflag [#allocation4], 1
    %13 = vsyncpa %s12, 0
    %14 = vsyncpa [#allocation7], 0
    %s15 = scalar_lea.sflag [#allocation7], 1
    %16 = vsyncpa %s15, 0
    loop: start=0, step=1, limit=4
    $region2: #{tpu_custom_call.1} parent=1 // loop_pre_header
      _
    $region3: #{tpu_custom_call.1} parent=1 // loop_header
      %s18 = sphi 0, %s22
      %p19 = scmp.ge.s32.totalorder %s18, 4
      %s25 = sphi 0, %s44
      %s26 = sphi 0, %s40
      %s27 = sphi 0, %s36
      %s28 = sphi 0, %s25
      %s29 = sphi 0, %s26
      %s30 = sphi 0, %s27
      %s31 = sphi 0, %s28
      %s32 = sphi 0, %s29
      %s33 = sphi 0, %s30
      %s51 = sphi 0, %s53
      %s54 = sphi 0, %s51
      %s55 = sphi 0, %s54
      %s71 = sphi 0, %s55
      %s79 = sphi 0, %s81
      %s82 = sphi 0, %s79
      %s83 = sphi 0, %s82
      %s99 = sphi 0, %s83
      %s107 = sphi 0, %s109
      %s110 = sphi 0, %s107
      %s111 = sphi 0, %s110
      %s127 = sphi 0, %s111
    $region4: #{tpu_custom_call.1} parent=1 // loop_header_branch
      %21 = sbr.rel (%p19) target = $region8
    $region5: #{tpu_custom_call.1} parent=1 // loop_body
      %s23 = ssub.s32 %s18, 1
      %s24 = ssub.s32 %s18, 2
      %s34 = sadd.s32 1, %s27
      %p35 = scmp.ge.s32.totalorder %s34, 1
      %s36 = scalar_select %p35, 0, %s34
      %s37 = sadd.s32 1, %s26
      %s38 = scalar_select %p35, %s37, %s26
      %p39 = scmp.ge.s32.totalorder %s38, 1
      %s40 = scalar_select %p39, 0, %s38
      %s41 = sadd.s32 1, %s25
      %s42 = scalar_select %p39, %s41, %s25
      %p43 = scmp.ge.s32.totalorder %s42, 2
      %s44 = scalar_select %p43, 0, %s42
      %s45 = ssub.s32 %s25, %s44
      %s46 = ssub.s32 %s27, %s36
      %s47 = sor.u32 %s45, %s46
      %s48 = ssub.s32 %s26, %s40
      %s49 = sor.u32 %s47, %s48
      %p50 = scmp.eq.s32.totalorder %s49, 0
      %s52 = sadd.s32 %s51, 1
      %s53 = scalar_select %p50, %s51, %s52
      %p56 = pneg %p50
      %p57 = scmp.eq.s32.totalorder %s18, 1
      %p58 = por %p56, %p57
      %p59 = scmp.ne.s32.totalorder %s51, %s54
      %p60 = scmp.eq.s32.totalorder %s18, 0
      %p61 = por %p59, %p60
      %p62 = scmp.ne.s32.totalorder %s51, %s54
      %p63 = scmp.eq.s32.totalorder %s23, 1
      %p64 = por %p62, %p63
      %p65 = scmp.ne.s32.totalorder %s54, %s55
      %p66 = scmp.eq.s32.totalorder %s23, 0
      %p67 = por %p65, %p66
      %p68 = scmp.ne.s32.totalorder %s54, %s55
      %p69 = scmp.eq.s32.totalorder %s24, 1
      %p70 = por %p68, %p69
      %p72 = scmp.ne.s32.totalorder %s55, %s71
      %p73 = scmp.eq.s32.totalorder %s24, 0
      %p74 = por %p72, %p73
      %s75 = ssub.s32 %s25, %s44
      %s76 = ssub.s32 %s26, %s40
      %s77 = sor.u32 %s75, %s76
      %p78 = scmp.eq.s32.totalorder %s77, 0
      %s80 = sadd.s32 %s79, 1
      %s81 = scalar_select %p78, %s79, %s80
      %p84 = pneg %p78
      %p85 = scmp.eq.s32.totalorder %s18, 1
      %p86 = por %p84, %p85
      %p87 = scmp.ne.s32.totalorder %s79, %s82
      %p88 = scmp.eq.s32.totalorder %s18, 0
      %p89 = por %p87, %p88
      %p90 = scmp.ne.s32.totalorder %s79, %s82
      %p91 = scmp.eq.s32.totalorder %s23, 1
      %p92 = por %p90, %p91
      %p93 = scmp.ne.s32.totalorder %s82, %s83
      %p94 = scmp.eq.s32.totalorder %s23, 0
      %p95 = por %p93, %p94
      %p96 = scmp.ne.s32.totalorder %s82, %s83
      %p97 = scmp.eq.s32.totalorder %s24, 1
      %p98 = por %p96, %p97
      %p100 = scmp.ne.s32.totalorder %s83, %s99
      %p101 = scmp.eq.s32.totalorder %s24, 0
      %p102 = por %p100, %p101
      %s103 = ssub.s32 %s25, %s44
      %s104 = ssub.s32 %s26, %s40
      %s105 = sor.u32 %s103, %s104
      %p106 = scmp.eq.s32.totalorder %s105, 0
      %s108 = sadd.s32 %s107, 1
      %s109 = scalar_select %p106, %s107, %s108
      %p112 = pneg %p106
      %p113 = scmp.eq.s32.totalorder %s18, 1
      %p114 = por %p112, %p113
      %p115 = scmp.ne.s32.totalorder %s107, %s110
      %p116 = scmp.eq.s32.totalorder %s18, 0
      %p117 = por %p115, %p116
      %p118 = scmp.ne.s32.totalorder %s107, %s110
      %p119 = scmp.eq.s32.totalorder %s23, 1
      %p120 = por %p118, %p119
      %p121 = scmp.ne.s32.totalorder %s110, %s111
      %p122 = scmp.eq.s32.totalorder %s23, 0
      %p123 = por %p121, %p122
      %p124 = scmp.ne.s32.totalorder %s110, %s111
      %p125 = scmp.eq.s32.totalorder %s24, 1
      %p126 = por %p124, %p125
      %p128 = scmp.ne.s32.totalorder %s111, %s127
      %p129 = scmp.eq.s32.totalorder %s24, 0
      %p130 = por %p128, %p129
      %p131 = scmp.le.s32.totalorder 1, %s18
      %p132 = scmp.lt.s32.totalorder %s18, 3
      %p133 = pnand %p131, %p132
      %p134 = pneg %p133
      // Predicated region
      $region9: #{tpu_custom_call.1} parent=5 // pred_check
        _
      $region10: #{tpu_custom_call.1} parent=5 // pred_check_branch
        %136 = sbr.rel (%p133) target = $region12
      $region11: #{tpu_custom_call.1} parent=5 // pred_region
        %s137 = ssub.s32 %s18, 1
      $region12: #{tpu_custom_call.1} parent=5 // pred_fallthru
        _
      %p138 = scmp.lt.s32.totalorder %s18, 2
      // Predicated region
      $region13: #{tpu_custom_call.1} parent=5 // pred_check
        %p139 = pneg %p138
      $region14: #{tpu_custom_call.1} parent=5 // pred_check_branch
        %141 = sbr.rel (%p139) target = $region16
      $region15: #{tpu_custom_call.1} parent=5 // pred_region
        // Predicated region
        $region17: #{tpu_custom_call.1} parent=15 // pred_check
          %p142 = pneg %p61
        $region18: #{tpu_custom_call.1} parent=15 // pred_check_branch
          %144 = sbr.rel (%p142) target = $region20
        $region19: #{tpu_custom_call.1} parent=15 // pred_region
          %s145 = sand.u32 %s51, 1
          %s146 = scalar_lea.sflag [#allocation3], %s145
          %s147 = sand.u32 %s51, 1
          %s148 = smul.addr %s147, 8
          %s149 = scalar_lea.vmem [#allocation2], %s148
          %s150 = smul.u32 2, %s26
          %152 = vsyncadd %s146, 0
          %s153 = smul.addr %s27, 2
          %s154 = sadd.s32 %s150, %s153
          %s155 = smul.addr %s25, 2
          %s156 = sadd.s32 %s154, %s155
          %s157 = smul.addr %s156, 4
          %s158 = scalar_lea.hbm %s0, %s157
          %s160 = sshll.u32 %s158, 4
          %s161 = int_to_ptr.hbm [resolvable:$true] %s160
          %s162 = sshll.u32 %s149, 4
          %s163 = int_to_ptr.vmem [resolvable:$true] %s162
          %165 = dma.hbm_to_vmem [thread:$0]  %s161, 128, %s163, %s146
        $region20: #{tpu_custom_call.1} parent=15 // pred_fallthru
          _
      $region16: #{tpu_custom_call.1} parent=5 // pred_fallthru
        _
      %p166 = scmp.le.s32.totalorder 1, %s18
      %p167 = scmp.lt.s32.totalorder %s18, 3
      %p168 = pnand %p166, %p167
      %p169 = pneg %p168
      // Predicated region
      $region21: #{tpu_custom_call.1} parent=5 // pred_check
        _
      $region22: #{tpu_custom_call.1} parent=5 // pred_check_branch
        %171 = sbr.rel (%p168) target = $region24
      $region23: #{tpu_custom_call.1} parent=5 // pred_region
        %s172 = ssub.s32 %s18, 1
        %s173 = sand.u32 %s54, 1
        %s174 = scalar_lea.sflag [#allocation3], %s173
        %s175 = sand.u32 %s54, 1
        %s176 = smul.addr %s175, 8
        %s177 = scalar_lea.vmem [#allocation2], %s176
        // Predicated region
        $region25: #{tpu_custom_call.1} parent=23 // pred_check
          %p178 = pneg %p67
        $region26: #{tpu_custom_call.1} parent=23 // pred_check_branch
          %180 = sbr.rel (%p178) target = $region28
        $region27: #{tpu_custom_call.1} parent=23 // pred_region
          %182 = dma.done %s174, 128
        $region28: #{tpu_custom_call.1} parent=23 // pred_fallthru
          _
        %s183 = sand.u32 %s54, 1
        %s184 = scalar_lea.sflag [#allocation3], %s183
        %s185 = sand.u32 %s54, 1
        %s186 = smul.addr %s185, 8
        %s187 = scalar_lea.vmem [#allocation2], %s186
        %p188 = pneg %p67
        %p189 = pneg %p64
        %p190 = pneg %p95
        %p191 = pneg %p92
        %s192 = sand.u32 %s82, 1
        %s193 = scalar_lea.sflag [#allocation4], %s192
        %s194 = sand.u32 %s82, 1
        %s195 = smul.addr %s194, 2
        %s196 = scalar_lea.vmem [#allocation5], %s195
        %p197 = pneg %p123
        %p198 = pneg %p120
        %s199 = sand.u32 %s110, 1
        %s200 = scalar_lea.sflag [#allocation7], %s199
        %s201 = sand.u32 %s110, 1
        %s202 = smul.addr %s201, 2
        %s203 = scalar_lea.vmem [#allocation6], %s202
        %s204 = smul.u32 2, %s29
        %s205 = smul.u32 2, %s29
        %s206 = smul.u32 2, %s29
        %v207 = vld [vmem:[%s177] sm:$0xff]
        %209 = vst [vmem:[#allocation1] ss:$2 sm:$0xff] %v207
        %v210 = vld.sshfl [vmem:[#allocation1] sm:$0xff pattern:$0x75316420]
        %v211 = vld.sshfl [vmem:[#allocation1 + $0x8] sm:$0xff pattern:$0x75316420]
        %vm214 = vcmask 1043456
        %v215 = vsel %vm214, %v210, 0.0
        %v216 = vrot.slane %v215, 4
        %v217 = vadd.f32 %v215, %v216
        %v218 = vrot.slane %v217, 2
        %v219 = vadd.f32 %v217, %v218
        %v220 = vrot.slane %v219, 1
        %v221 = vadd.f32 %v219, %v220
        %v222 = vsel %vm214, %v211, 0.0
        %v223 = vrot.slane %v222, 4
        %v224 = vadd.f32 %v222, %v223
        %v225 = vrot.slane %v224, 2
        %v226 = vadd.f32 %v224, %v225
        %v227 = vrot.slane %v226, 1
        %v228 = vadd.f32 %v226, %v227
        %229 = vst [vmem:[#allocation1] ss:$2 sm:$0xff] %v207
        %v230 = vld.sshfl [vmem:[#allocation1] sm:$0xff pattern:$0x75316420]
        %v231 = vld.sshfl [vmem:[#allocation1 + $0x8] sm:$0xff pattern:$0x75316420]
        %v234 = vsel %vm214, %v230, -inf
        %v235 = vrot.slane %v234, 4
        %v236 = vmax.f32 %v234, %v235
        %v237 = vrot.slane %v236, 2
        %v238 = vmax.f32 %v236, %v237
        %v239 = vrot.slane %v238, 1
        %v240 = vmax.f32 %v238, %v239
        %v241 = vsel %vm214, %v231, -inf
        %v242 = vrot.slane %v241, 4
        %v243 = vmax.f32 %v241, %v242
        %v244 = vrot.slane %v243, 2
        %v245 = vmax.f32 %v243, %v244
        %v246 = vrot.slane %v245, 1
        %v247 = vmax.f32 %v245, %v246
        %p248 = scmp.eq.s32.totalorder %s30, 0
        // Predicated region
        $region29: #{tpu_custom_call.1} parent=23 // pred_check
          %p249 = pneg %p248
        $region30: #{tpu_custom_call.1} parent=23 // pred_check_branch
          %251 = sbr.rel (%p249) target = $region32
        $region31: #{tpu_custom_call.1} parent=23 // pred_region
          %v254 = vrot.slane %v228, 7
          %vm255 = vcmask 1040384
          %v256 = vsel %vm255, %v221, %v254
          %v258 = vlaneseq
          %vm259 = vcmp.ge.s32.totalorder %v258, 0
          %vm260 = vcmp.lt.s32.totalorder %v258, 256
          %vm261 = vmand %vm259, %vm260
          %262 = vst.msk [vmem:[%s196] sm:$0x3] %vm261, %v256
          %v265 = vrot.slane %v247, 7
          %v266 = vsel %vm255, %v240, %v265
          %268 = vst.msk [vmem:[%s203] sm:$0x3] %vm261, %v266
        $region32: #{tpu_custom_call.1} parent=23 // pred_fallthru
          _
        %p269 = scmp.ne.s32.totalorder %s30, 0
        // Predicated region
        $region33: #{tpu_custom_call.1} parent=23 // pred_check
          %p270 = pneg %p269
        $region34: #{tpu_custom_call.1} parent=23 // pred_check_branch
          %272 = sbr.rel (%p270) target = $region36
        $region35: #{tpu_custom_call.1} parent=23 // pred_region
          %v273 = vld [vmem:[%s196] sm:$0x3]
          %v276 = vrot.slane %v228, 7
          %vm277 = vcmask 1040384
          %v278 = vsel %vm277, %v221, %v276
          %v280 = vadd.f32 %v273, %v278
          %v281 = vlaneseq
          %vm282 = vcmp.ge.s32.totalorder %v281, 0
          %vm283 = vcmp.lt.s32.totalorder %v281, 256
          %vm284 = vmand %vm282, %vm283
          %285 = vst.msk [vmem:[%s196] sm:$0x3] %vm284, %v280
          %v286 = vld [vmem:[%s203] sm:$0x3]
          %v289 = vrot.slane %v247, 7
          %v290 = vsel %vm277, %v240, %v289
          %v292 = vmax.f32 %v286, %v290
          %293 = vst.msk [vmem:[%s203] sm:$0x3] %vm284, %v292
        $region36: #{tpu_custom_call.1} parent=23 // pred_fallthru
          _
        %s294 = sand.u32 %s82, 1
        %s295 = scalar_lea.sflag [#allocation4], %s294
        %s296 = sand.u32 %s82, 1
        %s297 = smul.addr %s296, 2
        %s298 = scalar_lea.vmem [#allocation5], %s297
        %s299 = sand.u32 %s110, 1
        %s300 = scalar_lea.sflag [#allocation7], %s299
        %s301 = sand.u32 %s110, 1
        %s302 = smul.addr %s301, 2
        %s303 = scalar_lea.vmem [#allocation6], %s302
        // Predicated region
        $region37: #{tpu_custom_call.1} parent=23 // pred_check
          %p304 = pneg %p92
        $region38: #{tpu_custom_call.1} parent=23 // pred_check_branch
          %306 = sbr.rel (%p304) target = $region40
        $region39: #{tpu_custom_call.1} parent=23 // pred_region
          %s307 = smul.u32 2, %s29
          %309 = vsyncadd %s295, 0
          %s310 = smul.addr %s28, 2
          %s311 = sadd.s32 %s307, %s310
          %s312 = scalar_lea.hbm %s1, %s311
          %s314 = sshll.u32 %s298, 4
          %s315 = int_to_ptr.vmem [resolvable:$true] %s314
          %s316 = sshll.u32 %s312, 4
          %s317 = int_to_ptr.hbm [resolvable:$true] %s316
          %319 = dma.vmem_to_hbm [thread:$0]  %s315, 32, %s317, %s295
        $region40: #{tpu_custom_call.1} parent=23 // pred_fallthru
          _
        // Predicated region
        $region41: #{tpu_custom_call.1} parent=23 // pred_check
          %p320 = pneg %p120
        $region42: #{tpu_custom_call.1} parent=23 // pred_check_branch
          %322 = sbr.rel (%p320) target = $region44
        $region43: #{tpu_custom_call.1} parent=23 // pred_region
          %s323 = smul.u32 2, %s29
          %325 = vsyncadd %s300, 0
          %s326 = smul.addr %s28, 2
          %s327 = sadd.s32 %s323, %s326
          %s328 = scalar_lea.hbm %s2, %s327
          %s330 = sshll.u32 %s303, 4
          %s331 = int_to_ptr.vmem [resolvable:$true] %s330
          %s332 = sshll.u32 %s328, 4
          %s333 = int_to_ptr.hbm [resolvable:$true] %s332
          %335 = dma.vmem_to_hbm [thread:$0]  %s331, 32, %s333, %s300
        $region44: #{tpu_custom_call.1} parent=23 // pred_fallthru
          _
      $region24: #{tpu_custom_call.1} parent=5 // pred_fallthru
        _
      %p336 = scmp.le.s32.totalorder 2, %s18
      // Predicated region
      $region45: #{tpu_custom_call.1} parent=5 // pred_check
        %p337 = pneg %p336
      $region46: #{tpu_custom_call.1} parent=5 // pred_check_branch
        %339 = sbr.rel (%p337) target = $region48
      $region47: #{tpu_custom_call.1} parent=5 // pred_region
        %s340 = ssub.s32 %s18, 2
        // Predicated region
        $region49: #{tpu_custom_call.1} parent=47 // pred_check
          %p341 = pneg %p98
        $region50: #{tpu_custom_call.1} parent=47 // pred_check_branch
          %343 = sbr.rel (%p341) target = $region52
        $region51: #{tpu_custom_call.1} parent=47 // pred_region
          %s344 = sand.u32 %s83, 1
          %s345 = scalar_lea.sflag [#allocation4], %s344
          %s346 = sand.u32 %s83, 1
          %s347 = smul.addr %s346, 2
          %s348 = scalar_lea.vmem [#allocation5], %s347
          %350 = dma.done %s345, 32
        $region52: #{tpu_custom_call.1} parent=47 // pred_fallthru
          _
        // Predicated region
        $region53: #{tpu_custom_call.1} parent=47 // pred_check
          %p351 = pneg %p126
        $region54: #{tpu_custom_call.1} parent=47 // pred_check_branch
          %353 = sbr.rel (%p351) target = $region56
        $region55: #{tpu_custom_call.1} parent=47 // pred_region
          %s354 = sand.u32 %s111, 1
          %s355 = scalar_lea.sflag [#allocation7], %s354
          %s356 = sand.u32 %s111, 1
          %s357 = smul.addr %s356, 2
          %s358 = scalar_lea.vmem [#allocation6], %s357
          %360 = dma.done %s355, 32
        $region56: #{tpu_custom_call.1} parent=47 // pred_fallthru
          _
      $region48: #{tpu_custom_call.1} parent=5 // pred_fallthru
        _
    $region6: #{tpu_custom_call.1} parent=1 // loop_footer
      %s22 = sadd.s32 1, %s18
    $region7: #{tpu_custom_call.1} parent=1 // loop_footer_branch
      %17 = sbr.rel target = $region3
    $region8: #{tpu_custom_call.1} parent=1 // loop_exit
      _
    %361 = vsyncpa [#allocation3], 1
    %s362 = scalar_lea.sflag [#allocation3], 1
    %363 = vsyncpa %s362, 1
    %364 = vsyncpa [#allocation4], 1
    %s365 = scalar_lea.sflag [#allocation4], 1
    %366 = vsyncpa %s365, 1
    %367 = vsyncpa [#allocation7], 1
    %s368 = scalar_lea.sflag [#allocation7], 1
    %369 = vsyncpa %s368, 1

</llo_original>
